<compile_context>
chip_gen: v5e
topology: v5e:2x2
jax: 0.10.0
libtpu: 0.0.40
codegen_flags: <defaults>
</compile_context>

<pallas_src>
import functools
import math

import jax
import jax.numpy as jnp
from jax.experimental import pallas as pl
from jax.experimental.pallas import tpu as pltpu


def _round_up(x, m):
    return (x + m - 1) // m * m


def highway_kernel(x_ref, w_ref, b_ref, o_ref, *, d_real, d_pad):
    # x tile in native dtype straight into the MXU; f32 accumulation.
    x = x_ref[...]                                            # (TB, Dp)
    hz = jnp.dot(x, w_ref[...], preferred_element_type=jnp.float32)  # (TB, 2*Dp)
    hz = hz + b_ref[...]                                      # bias is f32

    # Tile-aligned static slices (Dp is a multiple of 128) -> free.
    h = jnp.maximum(hz[:, :d_pad], 0.0)                       # relu branch
    g = hz[:, d_pad:]                                         # gate logits

    # Mask padded feature columns so the softmax only spans the real D features.
    col = jax.lax.broadcasted_iota(jnp.int32, g.shape, 1)
    g = jnp.where(col < d_real, g, jnp.float32(-1e30))

    g = g - jnp.max(g, axis=-1, keepdims=True)
    e = jnp.exp(g)
    gate = e * pl.reciprocal(jnp.sum(e, axis=-1, keepdims=True), approx=True)

    xf = x.astype(jnp.float32)
    o_ref[...] = (h * gate + (1.0 - gate) * xf).astype(o_ref.dtype)


def prepare_highway_params(w_normal, b_normal, w_gate, b_gate,
                           *, lane=128, weight_dtype=None):
    """One-time weight prep: transpose (out,in)->(in,out), pad feature dim to a
    multiple of 128, fuse [normal | gate] along the output axis."""
    D = w_normal.shape[0]
    Dp = _round_up(max(D, lane), lane)

    def pad_wt(w):                       # (out, in) -> (Dp, Dp) of W^T
        return jnp.pad(w.T, ((0, Dp - D), (0, Dp - D)))

    def pad_b(b):
        return jnp.pad(b, (0, Dp - D))

    w_fused = jnp.concatenate([pad_wt(w_normal), pad_wt(w_gate)], axis=1)  # (Dp, 2Dp)
    b_fused = jnp.concatenate([pad_b(b_normal), pad_b(b_gate)]
                              ).reshape(1, 2 * Dp).astype(jnp.float32)
    if weight_dtype is not None:
        w_fused = w_fused.astype(weight_dtype)
    return w_fused, b_fused


@functools.partial(jax.jit, static_argnames=("d_real", "block_b"))
def highway_mlp(x, w_fused, b_fused, *, d_real, block_b=256):
    """x: (B, D) with D == d_real; w_fused: (Dp, 2*Dp); b_fused: (1, 2*Dp)."""
    B, D = x.shape
    Dp = w_fused.shape[0]

    # Batch tile: multiple of 8 sublanes, up to block_b rows; pad B to fit grid.
    tb = min(block_b, _round_up(B, 8))
    Bp = _round_up(B, tb)
    x_p = jnp.pad(x, ((0, Bp - B), (0, Dp - D)))

    # VMEM budget (stay within v7x's 64 MiB per-TC): fused weight (resident) +
    # double-buffered x/out tiles + in-kernel f32 intermediates + slack.
    itemsize = jnp.dtype(x.dtype).itemsize
    w_bytes = w_fused.size * jnp.dtype(w_fused.dtype).itemsize
    tile_bytes = tb * Dp * itemsize
    est = (2 * (w_bytes + b_fused.size * 4)
           + 4 * tile_bytes                 # 2x-buffered in + out tiles
           + 4 * tb * 2 * Dp * 4            # f32 intermediates
           + (2 << 20))
    vmem_limit = int(min(max(est, 32 * 1024 * 1024), 64 * 1024 * 1024))

    kernel = functools.partial(highway_kernel, d_real=d_real, d_pad=Dp)

    out = pl.pallas_call(
        kernel,
        out_shape=jax.ShapeDtypeStruct((Bp, Dp), x.dtype),
        grid=(Bp // tb,),
        in_specs=[
            pl.BlockSpec((tb, Dp), lambda i: (i, 0)),        # x tile (pipelined)
            pl.BlockSpec((Dp, 2 * Dp), lambda i: (0, 0)),    # fused weights (resident)
            pl.BlockSpec((1, 2 * Dp), lambda i: (0, 0)),     # fused bias (resident)
        ],
        out_specs=pl.BlockSpec((tb, Dp), lambda i: (i, 0)),
        compiler_params=pltpu.CompilerParams(
            dimension_semantics=("parallel",),
            vmem_limit_bytes=vmem_limit,
        ),
    )(x_p, w_fused, b_fused)

    # TODO(synk): for very large D (weights overflowing VMEM) add a K-reduction
    # grid axis with an f32 accumulator scratch; N must stay full because the
    # softmax reduces over the feature axis.
    return out[:B, :D]


def reference(x, w_normal, b_normal, w_gate, b_gate):
    h = jnp.maximum(x @ w_normal.T + b_normal, 0.0)
    gate = jax.nn.softmax(x @ w_gate.T + b_gate, axis=-1)
    return h * gate + (1.0 - gate) * x


if __name__ == "__main__":
    key = jax.random.PRNGKey(0)
    batch, input_size = 8, 32
    gate_bias = -2.0

    kx, kwn, kbn, kwg = jax.random.split(key, 4)
    bound = 1.0 / math.sqrt(input_size)

    x = jax.random.normal(kx, (batch, input_size), dtype=jnp.float32)
    # Deterministic init mimicking torch.nn.Linear (uniform in [-1/sqrt(in), 1/sqrt(in)]).
    w_normal = jax.random.uniform(kwn, (input_size, input_size), jnp.float32, -bound, bound)
    b_normal = jax.random.uniform(kbn, (input_size,), jnp.float32, -bound, bound)
    w_gate = jax.random.uniform(kwg, (input_size, input_size), jnp.float32, -bound, bound)
    b_gate = jnp.full((input_size,), gate_bias, dtype=jnp.float32)  # gate_layer.bias.data.fill_(-2)

    # Weight prep (transpose / fuse / pad) happens ONCE, outside the hot path.
    w_fused, b_fused = prepare_highway_params(w_normal, b_normal, w_gate, b_gate)

    out = highway_mlp(x, w_fused, b_fused, d_real=input_size)
    out = jax.block_until_ready(out)

    ref = reference(x, w_normal, b_normal, w_gate, b_gate)
    assert out.shape == (batch, input_size)
    assert jnp.allclose(out, ref, atol=1e-3, rtol=1e-3), "mismatch vs reference"

    print("KERNEL_OK")
</pallas_src>

<mosaic_0001>
module attributes {stable_mosaic.version = 11 : i64} {
  func.func @highway_kernel(%arg0: i32, %arg1: memref<8x128xf32, #tpu.memory_space<vmem>>, %arg2: memref<128x256xf32, #tpu.memory_space<vmem>>, %arg3: memref<1x256xf32, #tpu.memory_space<vmem>>, %arg4: memref<8x128xf32, #tpu.memory_space<vmem>>) attributes {dimension_semantics = [#tpu.dimension_semantics<parallel>], iteration_bounds = array<i64: 1>, scalar_prefetch = 0 : i64, scratch_operands = 0 : i64, tpu.core_type = #tpu.core_type<tc>, window_params = [{transform_indices = @transform_0, window_bounds = array<i64: 8, 128>}, {pipeline_mode = #tpu.pipeline_mode<synchronous>, transform_indices = @transform_1, window_bounds = array<i64: 128, 256>}, {pipeline_mode = #tpu.pipeline_mode<synchronous>, transform_indices = @transform_2, window_bounds = array<i64: 1, 256>}, {transform_indices = @transform_3, window_bounds = array<i64: 8, 128>}]} {
    %c0 = arith.constant 0 : index
    %c0_0 = arith.constant 0 : index
    %0 = vector.load %arg1[%c0, %c0_0] : memref<8x128xf32, #tpu.memory_space<vmem>>, vector<8x128xf32>
    %c0_1 = arith.constant 0 : index
    %c0_2 = arith.constant 0 : index
    %1 = vector.load %arg2[%c0_1, %c0_2] : memref<128x256xf32, #tpu.memory_space<vmem>>, vector<128x256xf32>
    %cst = arith.constant dense<0.000000e+00> : vector<8x256xf32>
    %2 = tpu.matmul %0, %1, %cst {dimension_numbers = #tpu.dot_dimension_numbers<[1], [0], [0], [1], [0, 0, 1, 1], [], []>} : vector<8x128xf32>, vector<128x256xf32>, vector<8x256xf32> -> vector<8x256xf32>
    %c0_3 = arith.constant 0 : index
    %c0_4 = arith.constant 0 : index
    %3 = vector.load %arg3[%c0_3, %c0_4] : memref<1x256xf32, #tpu.memory_space<vmem>>, vector<1x256xf32>
    %4 = vector.broadcast %3 : vector<1x256xf32> to vector<8x256xf32>
    %5 = arith.addf %2, %4 : vector<8x256xf32>
    %6 = vector.extract_strided_slice %5 {offsets = [0, 0], sizes = [8, 128], strides = [1, 1]} : vector<8x256xf32> to vector<8x128xf32>
    %cst_5 = arith.constant 0.000000e+00 : f32
    %7 = vector.broadcast %cst_5 : f32 to vector<8x128xf32>
    %8 = arith.maximumf %6, %7 : vector<8x128xf32>
    %9 = vector.extract_strided_slice %5 {offsets = [0, 128], sizes = [8, 128], strides = [1, 1]} : vector<8x256xf32> to vector<8x128xf32>
    %10 = tpu.iota {dimensions = array<i32: 1>} : vector<8x128xi32>
    %c32_i32 = arith.constant 32 : i32
    %11 = vector.broadcast %c32_i32 : i32 to vector<8x128xi32>
    %12 = arith.cmpi slt, %10, %11 : vector<8x128xi32>
    %cst_6 = arith.constant -1.000000e+30 : f32
    %13 = vector.broadcast %cst_6 : f32 to vector<8x128xf32>
    %14 = arith.select %12, %9, %13 : vector<8x128xi1>, vector<8x128xf32>
    %cst_7 = arith.constant dense<0xFF800000> : vector<8xf32>
    %15 = vector.multi_reduction <maximumf>, %14, %cst_7 [1] : vector<8x128xf32> to vector<8xf32>
    %16 = vector.shape_cast %15 : vector<8xf32> to vector<8x1xf32>
    %17 = vector.broadcast %16 : vector<8x1xf32> to vector<8x128xf32>
    %18 = arith.subf %14, %17 : vector<8x128xf32>
    %19 = math.exp %18 : vector<8x128xf32>
    %cst_8 = arith.constant dense<0.000000e+00> : vector<8xf32>
    %20 = vector.multi_reduction <add>, %19, %cst_8 [1] : vector<8x128xf32> to vector<8xf32>
    %21 = vector.shape_cast %20 : vector<8xf32> to vector<8x1xf32>
    %22 = tpu.reciprocal %21 {approx = true} : vector<8x1xf32> -> vector<8x1xf32>
    %23 = vector.broadcast %22 : vector<8x1xf32> to vector<8x128xf32>
    %24 = arith.mulf %19, %23 : vector<8x128xf32>
    %25 = arith.mulf %8, %24 : vector<8x128xf32>
    %cst_9 = arith.constant 1.000000e+00 : f32
    %26 = vector.broadcast %cst_9 : f32 to vector<8x128xf32>
    %27 = arith.subf %26, %24 : vector<8x128xf32>
    %28 = arith.mulf %27, %0 : vector<8x128xf32>
    %29 = arith.addf %25, %28 : vector<8x128xf32>
    %c0_10 = arith.constant 0 : index
    %c0_11 = arith.constant 0 : index
    %30 = vector.load %arg4[%c0_10, %c0_11] : memref<8x128xf32, #tpu.memory_space<vmem>>, vector<8x128xf32>
    tpu.vector_store %arg4[%c0_10, %c0_11], %29 {strides = array<i32>} : memref<8x128xf32, #tpu.memory_space<vmem>>, vector<8x128xf32>,
    return
  }
  func.func @transform_0(%arg0: i32) -> (i32, i32) {
    %c0_i32 = arith.constant 0 : i32
    %c0_i32_0 = arith.constant 0 : i32
    return %arg0, %c0_i32 : i32, i32
  }
  func.func @transform_1(%arg0: i32) -> (i32, i32) {
    %c0_i32 = arith.constant 0 : i32
    %c0_i32_0 = arith.constant 0 : i32
    %c0_i32_1 = arith.constant 0 : i32
    return %c0_i32, %c0_i32_0 : i32, i32
  }
  func.func @transform_2(%arg0: i32) -> (i32, i32) {
    %c0_i32 = arith.constant 0 : i32
    %c0_i32_0 = arith.constant 0 : i32
    %c0_i32_1 = arith.constant 0 : i32
    return %c0_i32, %c0_i32_0 : i32, i32
  }
  func.func @transform_3(%arg0: i32) -> (i32, i32) {
    %c0_i32 = arith.constant 0 : i32
    %c0_i32_0 = arith.constant 0 : i32
    return %arg0, %c0_i32 : i32, i32
  }
}

</mosaic_0001>

<llo_original>
// kernel: highway_mlp.1
$region0: #{highway_mlp.1}
  #allocation0 [shape = 'u32[]', space=smem, size = 0x4, offset = 0x4, fixed_abs, tag = 'smem constant byte address 0x4 - core index']
  #allocation1 [shape = 'u32[72,128]{1,0:T(1,128)}', space=vmem, size = 0x9000, scoped, tag = 'internal scratch']
  %s0 = inlined_call_operand.vmem [shape: f32[8,128], index: 0, kind: input, shape index: {}]
  %s1 = inlined_call_operand.hbm [shape: f32[128,256], index: 1, kind: input, shape index: {}]
  %s2 = inlined_call_operand.vmem [shape: f32[1,256], index: 2, kind: input, shape index: {}]
  %s3 = inlined_call_operand.hbm [shape: f32[8,128], index: 3, kind: output, shape index: {}]
  %s4 = sld [smem:[#allocation0]]
  $region26: #{highway_mlp.1} parent=0
    _
  %s6 = ssub.s32 1, %s4
  %s7 = scalar_select 0, %s6, %s4
  $region1: #{highway_mlp.1} parent=0
    #allocation2 [shape = 'u8[131072]{0}', space=vmem, size = 0x20000, scoped, tag = 'input window, operand 1, single buffered']
    #allocation3 [shape = 's32[1]{0}', space=sflag, size = 0x4, scoped, tag = 'scoped memory for highway_mlp.1']
    #allocation4 [shape = 's32[1]{0}', space=sflag, size = 0x4, scoped, tag = 'scoped memory for highway_mlp.1']
    #allocation5 [shape = 'u8[4096]{0}', space=vmem, size = 0x1000, scoped, tag = 'output window, operand 0, single buffered']
    %8 = vsyncpa [#allocation3], 0
    %9 = vsyncpa [#allocation4], 0
    // Predicated region
    $region2: #{highway_mlp.1} parent=1 // pred_check
      _
    $region3: #{highway_mlp.1} parent=1 // pred_check_branch
      %11 = sbr.rel (0) target = $region5
    $region4: #{highway_mlp.1} parent=1 // pred_region
      _
    $region5: #{highway_mlp.1} parent=1 // pred_fallthru
      _
    // Predicated region
    $region6: #{highway_mlp.1} parent=1 // pred_check
      _
    $region7: #{highway_mlp.1} parent=1 // pred_check_branch
      %13 = sbr.rel (0) target = $region9
    $region8: #{highway_mlp.1} parent=1 // pred_region
      %15 = vsyncadd [#allocation3], 0
      %s16 = sshll.u32 %s1, 4
      %s17 = int_to_ptr.hbm [resolvable:$true] %s16
      %s18 = sshll.u32 [#allocation2], 4
      %s19 = int_to_ptr.vmem [resolvable:$true] %s18
      %24 = dma.hbm_to_vmem [thread:$0]  %s17, 4096, %s19, [#allocation3], 256, 256, 16
    $region9: #{highway_mlp.1} parent=1 // pred_fallthru
      _
    // Predicated region
    $region10: #{highway_mlp.1} parent=1 // pred_check
      _
    $region11: #{highway_mlp.1} parent=1 // pred_check_branch
      %26 = sbr.rel (0) target = $region13
    $region12: #{highway_mlp.1} parent=1 // pred_region
      _
    $region13: #{highway_mlp.1} parent=1 // pred_fallthru
      _
    // Predicated region
    $region14: #{highway_mlp.1} parent=1 // pred_check
      _
    $region15: #{highway_mlp.1} parent=1 // pred_check_branch
      %28 = sbr.rel (0) target = $region17
    $region16: #{highway_mlp.1} parent=1 // pred_region
      %30 = dma.done [#allocation3], 4096
    $region17: #{highway_mlp.1} parent=1 // pred_fallthru
      _
    %v31 = vld [vmem:[%s0] sm:$0xff]
    %v32 = vld [vmem:[#allocation2] sm:$0xff]
    %v33 = vld [vmem:[#allocation2 + $0x8] sm:$0xff]
    %v34 = vld [vmem:[#allocation2 + $0x10] sm:$0xff]
    %v35 = vld [vmem:[#allocation2 + $0x18] sm:$0xff]
    %v36 = vld [vmem:[#allocation2 + $0x20] sm:$0xff]
    %v37 = vld [vmem:[#allocation2 + $0x28] sm:$0xff]
    %v38 = vld [vmem:[#allocation2 + $0x30] sm:$0xff]
    %v39 = vld [vmem:[#allocation2 + $0x38] sm:$0xff]
    %v40 = vld [vmem:[#allocation2 + $0x40] sm:$0xff]
    %v41 = vld [vmem:[#allocation2 + $0x48] sm:$0xff]
    %v42 = vld [vmem:[#allocation2 + $0x50] sm:$0xff]
    %v43 = vld [vmem:[#allocation2 + $0x58] sm:$0xff]
    %v44 = vld [vmem:[#allocation2 + $0x60] sm:$0xff]
    %v45 = vld [vmem:[#allocation2 + $0x68] sm:$0xff]
    %v46 = vld [vmem:[#allocation2 + $0x70] sm:$0xff]
    %v47 = vld [vmem:[#allocation2 + $0x78] sm:$0xff]
    %v48 = vld [vmem:[#allocation2 + $0x80] sm:$0xff]
    %v49 = vld [vmem:[#allocation2 + $0x88] sm:$0xff]
    %v50 = vld [vmem:[#allocation2 + $0x90] sm:$0xff]
    %v51 = vld [vmem:[#allocation2 + $0x98] sm:$0xff]
    %v52 = vld [vmem:[#allocation2 + $0xa0] sm:$0xff]
    %v53 = vld [vmem:[#allocation2 + $0xa8] sm:$0xff]
    %v54 = vld [vmem:[#allocation2 + $0xb0] sm:$0xff]
    %v55 = vld [vmem:[#allocation2 + $0xb8] sm:$0xff]
    %v56 = vld [vmem:[#allocation2 + $0xc0] sm:$0xff]
    %v57 = vld [vmem:[#allocation2 + $0xc8] sm:$0xff]
    %v58 = vld [vmem:[#allocation2 + $0xd0] sm:$0xff]
    %v59 = vld [vmem:[#allocation2 + $0xd8] sm:$0xff]
    %v60 = vld [vmem:[#allocation2 + $0xe0] sm:$0xff]
    %v61 = vld [vmem:[#allocation2 + $0xe8] sm:$0xff]
    %v62 = vld [vmem:[#allocation2 + $0xf0] sm:$0xff]
    %v63 = vld [vmem:[#allocation2 + $0xf8] sm:$0xff]
    %v64 = vld [vmem:[%s2] sm:$0x3]
    %v66 = vperm.slane %v64, 0
    %v67 = vperm.slane %v64, 1
    %70 = vmatpush.msra.mxu0 %v62
    %71 = vmatpush.msra.mxu0 %v60
    %72 = vmatpush.msra.mxu0 %v58
    %73 = vmatpush.msra.mxu0 %v56
    %74 = vmatpush.msra.mxu0 %v54
    %75 = vmatpush.msra.mxu0 %v52
    %76 = vmatpush.msra.mxu0 %v50
    %77 = vmatpush.msra.mxu0 %v48
    %78 = vmatpush.msra.mxu0 %v46
    %79 = vmatpush.msra.mxu0 %v44
    %80 = vmatpush.msra.mxu0 %v42
    %81 = vmatpush.msra.mxu0 %v40
    %82 = vmatpush.msra.mxu0 %v38
    %83 = vmatpush.msra.mxu0 %v36
    %84 = vmatpush.msra.mxu0 %v34
    %85 = vmatpush.msra.mxu0 %v32
    %86 = vmatmul.f32.gmra.mxu0 %v31
    %v87 = vpop.f32.mrf.mxu0
    %v88 = vadd.f32 %v66, %v87
    %89 = vdwg.mxu0
    %90 = vmatpush.msra.mxu0 %v63
    %91 = vmatpush.msra.mxu0 %v61
    %92 = vmatpush.msra.mxu0 %v59
    %93 = vmatpush.msra.mxu0 %v57
    %94 = vmatpush.msra.mxu0 %v55
    %95 = vmatpush.msra.mxu0 %v53
    %96 = vmatpush.msra.mxu0 %v51
    %97 = vmatpush.msra.mxu0 %v49
    %98 = vmatpush.msra.mxu0 %v47
    %99 = vmatpush.msra.mxu0 %v45
    %100 = vmatpush.msra.mxu0 %v43
    %101 = vmatpush.msra.mxu0 %v41
    %102 = vmatpush.msra.mxu0 %v39
    %103 = vmatpush.msra.mxu0 %v37
    %104 = vmatpush.msra.mxu0 %v35
    %105 = vmatpush.msra.mxu0 %v33
    %106 = vmatmul.f32.gmra.mxu0 %v31
    %v107 = vpop.f32.mrf.mxu0
    %v108 = vadd.f32 %v67, %v107
    %109 = vdwg.mxu0
    %v110 = vmax.f32 %v88, 0.0
    %v111 = vlaneseq
    %v112 = vand.u32 %v111, 127
    %vm113 = vcmp.lt.s32.totalorder %v112, 32
    %v114 = vsel %vm113, %v108, -1e+30
    %115 = vmax.xlane.f32.xlu0 %v114
    %v116 = vpop.xlane.xlu0 %115
    %v117 = vsub.f32 %v114, %v116
    %v118 = vmul.f32 %v117, 1.442695
    %v119 = vpow.pop %v118
    %120 = vadd.xlane.f32.xlu0 %v119
    %v121 = vpop.xlane.xlu0 %120
    %v122 = vrcp.pop %v121
    %v123 = vmul.f32 %v119, %v122
    %v124 = vmul.f32 %v110, %v123
    %v125 = vsub.f32 1.0, %v123
    %v126 = vmul.f32 %v125, %v31
    %v127 = vadd.f32 %v124, %v126
    %128 = vst [vmem:[#allocation5] sm:$0xff] %v127
    // Predicated region
    $region18: #{highway_mlp.1} parent=1 // pred_check
      _
    $region19: #{highway_mlp.1} parent=1 // pred_check_branch
      %130 = sbr.rel (0) target = $region21
    $region20: #{highway_mlp.1} parent=1 // pred_region
      %132 = vsyncadd [#allocation4], 0
      %s134 = sshll.u32 [#allocation5], 4
      %s135 = int_to_ptr.vmem [resolvable:$true] %s134
      %s136 = sshll.u32 %s3, 4
      %s137 = int_to_ptr.hbm [resolvable:$true] %s136
      %139 = dma.vmem_to_hbm [thread:$0]  %s135, 128, %s137, [#allocation4]
    $region21: #{highway_mlp.1} parent=1 // pred_fallthru
      _
    // Predicated region
    $region22: #{highway_mlp.1} parent=1 // pred_check
      _
    $region23: #{highway_mlp.1} parent=1 // pred_check_branch
      %141 = sbr.rel (0) target = $region25
    $region24: #{highway_mlp.1} parent=1 // pred_region
      %143 = dma.done [#allocation4], 128
    $region25: #{highway_mlp.1} parent=1 // pred_fallthru
      _
    %144 = vsyncpa [#allocation3], 1
    %145 = vsyncpa [#allocation4], 1

</llo_original>
